<compile_context>
chip_gen: v5e
topology: v5e:2x2
jax: 0.10.0
libtpu: 0.0.40
codegen_flags: <defaults>
</compile_context>

<pallas_src>
import math
from functools import partial

import jax
import jax.numpy as jnp
from jax.experimental import pallas as pl
from jax.experimental.pallas import tpu as pltpu

_LANES = 128
_SUBLANES = 8
_MAX_TILE_ROWS = 4096                  # (4096,128) f32 = 2 MiB per pipeline buffer
_VMEM_LIMIT_BYTES = 40 * 1024 * 1024   # explicit scoped-VMEM limit (safe on all gens)
_LOG2 = math.log(2.0)


def _round_up(x: int, m: int) -> int:
    return ((x + m - 1) // m) * m


def _make_kernel(tile_rows: int, inner: int, n_valid: int,
                 total_blocks: int, need_mask: bool):
    """Build the log-cosh partial-sum kernel for a (ncores, inner) grid."""
    n_groups = tile_rows // _SUBLANES

    def _fold(v):
        # (tile_rows, 128) -> (8, 128): pure VPU vadds across whole vregs
        # (reshape groups full (8,128) vreg tiles, so it is layout-free).
        return v.reshape(n_groups, _SUBLANES, _LANES).sum(axis=0)

    def kernel(yt_ref, yp_ref, out_ref, acc_ref):
        c = pl.program_id(0)
        i = pl.program_id(1)

        @pl.when(i == 0)
        def _():
            acc_ref[...] = jnp.zeros_like(acc_ref)

        # Cast in-register; inputs stream in their native dtype.
        x = yp_ref[...].astype(jnp.float32) - yt_ref[...].astype(jnp.float32)
        ax = jnp.abs(x)
        # log(cosh(x)) = |x| + log1p(exp(-2|x|)) - log(2)
        # (identical to x + softplus(-2x) - log(2); EUP-minimal form)
        lc = ax + jnp.log1p(jnp.exp(-2.0 * ax)) - _LOG2
        # Large-|x| override, exactly as in the PyTorch module.
        lc = jnp.where(ax > 10.0, ax, lc)

        if need_mask:
            block_idx = c * inner + i
            # Only the last real block (and any redundant clamped block after
            # it) can contain invalid / garbage elements.
            on_edge = block_idx >= (total_blocks - 1)

            @pl.when(on_edge)
            def _():
                row = jax.lax.broadcasted_iota(jnp.int32, (tile_rows, _LANES), 0)
                lane = jax.lax.broadcasted_iota(jnp.int32, (tile_rows, _LANES), 1)
                elem = (block_idx * tile_rows + row) * _LANES + lane
                masked = jnp.where(elem < n_valid, lc, 0.0)
                acc_ref[...] += _fold(masked)

            @pl.when(jnp.logical_not(on_edge))
            def _():
                acc_ref[...] += _fold(lc)
        else:
            acc_ref[...] += _fold(lc)

        # Single XLU cross-lane reduce (one vreg) at the end of this core's share.
        @pl.when(i == pl.num_programs(1) - 1)
        def _():
            out_ref[0, 0] = jnp.sum(acc_ref[...])

    return kernel


def log_cosh_loss(y_true: jax.Array, y_pred: jax.Array,
                  reduction: str = "mean") -> jax.Array:
    if reduction not in ("mean", "sum"):
        raise ValueError("LogCoshLoss: reduction not in ['mean', 'sum']")
    assert y_true.shape == y_pred.shape

    n = y_true.size
    if n == 0:
        # Match torch: mean of empty -> nan, sum of empty -> 0.
        return jnp.float32(jnp.nan) if reduction == "mean" else jnp.float32(0.0)

    # Flatten to a lane-dense (rows, 128) slab in the NATIVE dtype.
    # Padding happens only when n % 128 != 0 (<=127 extra elements) and the
    # padded lanes are exactly masked out inside the kernel.
    # TODO(synk): a fully zero-copy path for n % 128 != 0 would need manual
    # ragged-tail DMA (pl.ANY + make_async_copy); the pad copy is kept for
    # that rare case only.
    lane_pad = (-n) % _LANES

    def to_slab(a):
        flat = jnp.ravel(a)
        if lane_pad:
            flat = jnp.pad(flat, (0, lane_pad))
        return flat.reshape(-1, _LANES)

    yt = to_slab(y_true)
    yp = to_slab(y_pred)
    rows = yt.shape[0]

    # Sublane packing granularity of the native dtypes (8 f32 / 16 bf16 / 32 i8).
    gran = max(
        _SUBLANES,
        32 // jnp.dtype(y_true.dtype).itemsize,
        32 // jnp.dtype(y_pred.dtype).itemsize,
    )
    tile_rows = min(_MAX_TILE_ROWS, _round_up(rows, gran))
    total_blocks = pl.cdiv(rows, tile_rows)

    # Unconditional 2-way split across TensorCores whenever there is more than
    # one block (v7x megacore); a redundant trailing block on odd counts is
    # clamped in the index_map and fully masked in the kernel.
    ncores = 2 if total_blocks >= 2 else 1
    inner = pl.cdiv(total_blocks, ncores)
    redundant = (ncores * inner) != total_blocks

    need_mask = (ncores * inner * tile_rows * _LANES) != n
    kernel = _make_kernel(tile_rows, inner, n, total_blocks, need_mask)

    if redundant:
        def block_map(c, i):
            return (jnp.minimum(c * inner + i, total_blocks - 1), 0)
    else:
        def block_map(c, i):
            return (c * inner + i, 0)

    partials = pl.pallas_call(
        kernel,
        out_shape=jax.ShapeDtypeStruct((ncores, 1), jnp.float32),
        grid_spec=pltpu.PrefetchScalarGridSpec(
            num_scalar_prefetch=0,
            grid=(ncores, inner),
            in_specs=[
                pl.BlockSpec((tile_rows, _LANES), block_map),
                pl.BlockSpec((tile_rows, _LANES), block_map),
            ],
            out_specs=pl.BlockSpec((1, 1), lambda c, i: (c, 0),
                                   memory_space=pltpu.SMEM),
            scratch_shapes=[pltpu.VMEM((_SUBLANES, _LANES), jnp.float32)],
        ),
        compiler_params=pltpu.CompilerParams(
            dimension_semantics=("parallel", "arbitrary"),
            vmem_limit_bytes=_VMEM_LIMIT_BYTES),
    )(yt, yp)

    total = jnp.sum(partials)
    if reduction == "mean":
        return total / jnp.float32(n)
    return total


def _reference(y_true, y_pred, reduction="mean"):
    x = y_pred.astype(jnp.float32) - y_true.astype(jnp.float32)
    out = x + jax.nn.softplus(-2.0 * x) - _LOG2
    out = jnp.where(jnp.abs(x) > 10.0, jnp.abs(x), out)
    return jnp.mean(out) if reduction == "mean" else jnp.sum(out)


if __name__ == "__main__":
    key = jax.random.PRNGKey(0)

    ok = True
    # Case 1: clean NCHW f32 (no pad, no mask).
    # Case 2: awkward size exercising lane padding + edge-block masking.
    # Case 3: bf16 native-dtype streaming (16-row packing granularity).
    cases = [((2, 4, 16, 16), jnp.float32),
             ((3, 5, 7, 11), jnp.float32),
             ((2, 4, 16, 16), jnp.bfloat16)]

    for shape, dt in cases:
        k1, k2, key = jax.random.split(key, 3)
        # Scale up so some |x| > 10 elements exercise the override branch.
        y_true = (8.0 * jax.random.normal(k1, shape, dtype=jnp.float32)).astype(dt)
        y_pred = (8.0 * jax.random.normal(k2, shape, dtype=jnp.float32)).astype(dt)

        for red in ("mean", "sum"):
            out = jax.block_until_ready(log_cosh_loss(y_true, y_pred, red))
            ref = _reference(y_true, y_pred, red)
            if not jnp.allclose(out, ref, rtol=1e-5, atol=1e-4):
                ok = False
                print(f"MISMATCH (shape={shape}, dtype={dt}, {red}): "
                      f"kernel={out} ref={ref}")

    if ok:
        print("KERNEL_OK")
</pallas_src>

<mosaic_0001>
module attributes {stable_mosaic.version = 11 : i64} {
  func.func @kernel(%arg0: i32, %arg1: i32, %arg2: memref<16x128xf32, #tpu.memory_space<vmem>>, %arg3: memref<16x128xf32, #tpu.memory_space<vmem>>, %arg4: memref<1x1xf32, #tpu.memory_space<smem>>, %arg5: memref<8x128xf32, #tpu.memory_space<vmem>>) attributes {dimension_semantics = [#tpu.dimension_semantics<parallel>, #tpu.dimension_semantics<arbitrary>], iteration_bounds = array<i64: 1, 1>, scalar_prefetch = 0 : i64, scratch_operands = 1 : i64, tpu.core_type = #tpu.core_type<tc>, window_params = [{transform_indices = @transform_0, window_bounds = array<i64: 16, 128>}, {transform_indices = @transform_1, window_bounds = array<i64: 16, 128>}, {transform_indices = @transform_2, window_bounds = array<i64: 1, 1>}]} {
    %c0_i32 = arith.constant 0 : i32
    %0 = arith.cmpi eq, %arg1, %c0_i32 : i32
    %1 = arith.extui %0 : i1 to i32
    %c0_i32_0 = arith.constant 0 : i32
    %2 = arith.cmpi ne, %1, %c0_i32_0 : i32
    scf.if %2 {
      %cst_13 = arith.constant 0.000000e+00 : f32
      %25 = vector.broadcast %cst_13 : f32 to vector<8x128xf32>
      %c0_14 = arith.constant 0 : index
      %c0_15 = arith.constant 0 : index
      %26 = vector.load %arg5[%c0_14, %c0_15] : memref<8x128xf32, #tpu.memory_space<vmem>>, vector<8x128xf32>
      tpu.vector_store %arg5[%c0_14, %c0_15], %25 {strides = array<i32>} : memref<8x128xf32, #tpu.memory_space<vmem>>, vector<8x128xf32>,
    } else {
    }
    %c0 = arith.constant 0 : index
    %c0_1 = arith.constant 0 : index
    %3 = vector.load %arg3[%c0, %c0_1] : memref<16x128xf32, #tpu.memory_space<vmem>>, vector<16x128xf32>
    %c0_2 = arith.constant 0 : index
    %c0_3 = arith.constant 0 : index
    %4 = vector.load %arg2[%c0_2, %c0_3] : memref<16x128xf32, #tpu.memory_space<vmem>>, vector<16x128xf32>
    %5 = arith.subf %3, %4 : vector<16x128xf32>
    %6 = math.absf %5 : vector<16x128xf32>
    %cst = arith.constant -2.000000e+00 : f32
    %7 = vector.broadcast %cst : f32 to vector<16x128xf32>
    %8 = arith.mulf %7, %6 : vector<16x128xf32>
    %9 = math.exp %8 : vector<16x128xf32>
    %10 = math.log1p %9 : vector<16x128xf32>
    %11 = arith.addf %6, %10 : vector<16x128xf32>
    %cst_4 = arith.constant 0.693147182 : f32
    %12 = vector.broadcast %cst_4 : f32 to vector<16x128xf32>
    %13 = arith.subf %11, %12 : vector<16x128xf32>
    %cst_5 = arith.constant 1.000000e+01 : f32
    %14 = vector.broadcast %cst_5 : f32 to vector<16x128xf32>
    %15 = arith.cmpf ogt, %6, %14 : vector<16x128xf32>
    %16 = arith.select %15, %6, %13 : vector<16x128xi1>, vector<16x128xf32>
    %c0_6 = arith.constant 0 : index
    %c0_7 = arith.constant 0 : index
    %17 = vector.load %arg5[%c0_6, %c0_7] : memref<8x128xf32, #tpu.memory_space<vmem>>, vector<8x128xf32>
    %18 = vector.shape_cast %16 : vector<16x128xf32> to vector<2x8x128xf32>
    %cst_8 = arith.constant dense<0.000000e+00> : vector<8x128xf32>
    %19 = vector.multi_reduction <add>, %18, %cst_8 [0] : vector<2x8x128xf32> to vector<8x128xf32>
    %20 = arith.addf %17, %19 : vector<8x128xf32>
    %c0_9 = arith.constant 0 : index
    %c0_10 = arith.constant 0 : index
    %21 = vector.load %arg5[%c0_9, %c0_10] : memref<8x128xf32, #tpu.memory_space<vmem>>, vector<8x128xf32>
    tpu.vector_store %arg5[%c0_9, %c0_10], %20 {strides = array<i32>} : memref<8x128xf32, #tpu.memory_space<vmem>>, vector<8x128xf32>,
    %c0_i32_11 = arith.constant 0 : i32
    %22 = arith.cmpi eq, %arg1, %c0_i32_11 : i32
    %23 = arith.extui %22 : i1 to i32
    %c0_i32_12 = arith.constant 0 : i32
    %24 = arith.cmpi ne, %23, %c0_i32_12 : i32
    scf.if %24 {
      %c0_13 = arith.constant 0 : index
      %c0_14 = arith.constant 0 : index
      %25 = vector.load %arg5[%c0_13, %c0_14] : memref<8x128xf32, #tpu.memory_space<vmem>>, vector<8x128xf32>
      %26 = vector.shape_cast %25 : vector<8x128xf32> to vector<1x8x128xf32>
      %cst_15 = arith.constant dense<0.000000e+00> : vector<1xf32>
      %27 = vector.multi_reduction <add>, %26, %cst_15 [1, 2] : vector<1x8x128xf32> to vector<1xf32>
      %28 = vector.shape_cast %27 : vector<1xf32> to vector<1x1x1xf32>
      %29 = vector.extract %28[0, 0, 0] : f32 from vector<1x1x1xf32>
      %c0_16 = arith.constant 0 : index
      %c0_17 = arith.constant 0 : index
      %30 = memref.load %arg4[%c0_16, %c0_17] : memref<1x1xf32, #tpu.memory_space<smem>>
      memref.store %29, %arg4[%c0_16, %c0_17] : memref<1x1xf32, #tpu.memory_space<smem>>
    } else {
    }
    return
  }
  func.func @transform_0(%arg0: i32, %arg1: i32) -> (i32, i32) {
    %c1_i32 = arith.constant 1 : i32
    %0 = arith.muli %arg0, %c1_i32 : i32
    %1 = arith.addi %0, %arg1 : i32
    %c0_i32 = arith.constant 0 : i32
    %c0_i32_0 = arith.constant 0 : i32
    return %1, %c0_i32 : i32, i32
  }
  func.func @transform_1(%arg0: i32, %arg1: i32) -> (i32, i32) {
    %c1_i32 = arith.constant 1 : i32
    %0 = arith.muli %arg0, %c1_i32 : i32
    %1 = arith.addi %0, %arg1 : i32
    %c0_i32 = arith.constant 0 : i32
    %c0_i32_0 = arith.constant 0 : i32
    return %1, %c0_i32 : i32, i32
  }
  func.func @transform_2(%arg0: i32, %arg1: i32) -> (i32, i32) {
    %c0_i32 = arith.constant 0 : i32
    %c0_i32_0 = arith.constant 0 : i32
    return %arg0, %c0_i32 : i32, i32
  }
}

</mosaic_0001>

<llo_original>
// kernel: tpu_custom_call.1
$region0: #{tpu_custom_call.1}
  #allocation0 [shape = 'u32[]', space=smem, size = 0x4, offset = 0x4, fixed_abs, tag = 'smem constant byte address 0x4 - core index']
  #allocation1 [shape = 'u32[72,128]{1,0:T(1,128)}', space=vmem, size = 0x9000, scoped, tag = 'internal scratch']
  #allocation2 [shape = 'f32[8,128]{1,0:T(8,128)}', space=vmem, size = 0x1000, scoped, tag = 'scratch operand']
  %s0 = inlined_call_operand.hbm [shape: f32[16,128], index: 0, kind: input, shape index: {}]
  %s1 = inlined_call_operand.hbm [shape: f32[16,128], index: 1, kind: input, shape index: {}]
  %s2 = inlined_call_operand.hbm [shape: f32[1,1], index: 2, kind: output, shape index: {}]
  %s3 = sld [smem:[#allocation0]]
  $region34: #{tpu_custom_call.1} parent=0
    _
  %s5 = ssub.s32 1, %s3
  %s6 = scalar_select 0, %s5, %s3
  $region1: #{tpu_custom_call.1} parent=0
    #allocation3 [shape = 'u8[8192]{0}', space=vmem, size = 0x2000, scoped, tag = 'input window, operand 0, single buffered']
    #allocation4 [shape = 's32[1]{0}', space=sflag, size = 0x4, scoped, tag = 'scoped memory for tpu_custom_call.1']
    #allocation5 [shape = 's32[1]{0}', space=sflag, size = 0x4, scoped, tag = 'scoped memory for tpu_custom_call.1']
    #allocation6 [shape = 'u8[8192]{0}', space=vmem, size = 0x2000, scoped, tag = 'input window, operand 1, single buffered']
    #allocation7 [shape = 's32[1]{0}', space=sflag, size = 0x4, scoped, tag = 'scoped memory for tpu_custom_call.1']
    #allocation8 [shape = 'u8[512]{0}', space=smem, size = 0x200, scoped, tag = 'output window, operand 0, single buffered']
    %7 = vsyncpa [#allocation4], 0
    %8 = vsyncpa [#allocation7], 0
    %9 = vsyncpa [#allocation5], 0
    // Predicated region
    $region2: #{tpu_custom_call.1} parent=1 // pred_check
      _
    $region3: #{tpu_custom_call.1} parent=1 // pred_check_branch
      %11 = sbr.rel (0) target = $region5
    $region4: #{tpu_custom_call.1} parent=1 // pred_region
      %s12 = sadd.s32 0, 0
      %s13 = smul.u32 2, %s12
      %15 = vsyncadd [#allocation4], 0
      %s16 = smul.addr %s13, 8
      %s17 = scalar_lea.hbm %s0, %s16
      %s18 = sshll.u32 %s17, 4
      %s19 = int_to_ptr.hbm [resolvable:$true] %s18
      %s20 = sshll.u32 [#allocation3], 4
      %s21 = int_to_ptr.vmem [resolvable:$true] %s20
      %26 = dma.hbm_to_vmem [thread:$0]  %s19, 256, %s21, [#allocation4], 128, 128, 8
    $region5: #{tpu_custom_call.1} parent=1 // pred_fallthru
      _
    // Predicated region
    $region6: #{tpu_custom_call.1} parent=1 // pred_check
      _
    $region7: #{tpu_custom_call.1} parent=1 // pred_check_branch
      %28 = sbr.rel (0) target = $region9
    $region8: #{tpu_custom_call.1} parent=1 // pred_region
      %s29 = sadd.s32 0, 0
      %s30 = smul.u32 2, %s29
      %32 = vsyncadd [#allocation7], 0
      %s33 = smul.addr %s30, 8
      %s34 = scalar_lea.hbm %s1, %s33
      %s35 = sshll.u32 %s34, 4
      %s36 = int_to_ptr.hbm [resolvable:$true] %s35
      %s37 = sshll.u32 [#allocation6], 4
      %s38 = int_to_ptr.vmem [resolvable:$true] %s37
      %43 = dma.hbm_to_vmem [thread:$0]  %s36, 256, %s38, [#allocation7], 128, 128, 8
    $region9: #{tpu_custom_call.1} parent=1 // pred_fallthru
      _
    // Predicated region
    $region10: #{tpu_custom_call.1} parent=1 // pred_check
      _
    $region11: #{tpu_custom_call.1} parent=1 // pred_check_branch
      %45 = sbr.rel (0) target = $region13
    $region12: #{tpu_custom_call.1} parent=1 // pred_region
      %47 = dma.done [#allocation4], 256
    $region13: #{tpu_custom_call.1} parent=1 // pred_fallthru
      _
    // Predicated region
    $region14: #{tpu_custom_call.1} parent=1 // pred_check
      _
    $region15: #{tpu_custom_call.1} parent=1 // pred_check_branch
      %49 = sbr.rel (0) target = $region17
    $region16: #{tpu_custom_call.1} parent=1 // pred_region
      %51 = dma.done [#allocation7], 256
    $region17: #{tpu_custom_call.1} parent=1 // pred_fallthru
      _
    %s52 = sadd.s32 0, 0
    %s53 = smul.u32 2, %s52
    %s54 = sadd.s32 0, 0
    %s55 = smul.u32 2, %s54
    %p56 = scmp.eq.s32.totalorder 0, 0
    // Predicated region
    $region18: #{tpu_custom_call.1} parent=1 // pred_check
      %p57 = pneg %p56
    $region19: #{tpu_custom_call.1} parent=1 // pred_check_branch
      %59 = sbr.rel (%p57) target = $region21
    $region20: #{tpu_custom_call.1} parent=1 // pred_region
      %60 = vst [vmem:[#allocation2] sm:$0xff] 0.0
    $region21: #{tpu_custom_call.1} parent=1 // pred_fallthru
      _
    %v61 = vld [vmem:[#allocation6] sm:$0xff]
    %v62 = vld [vmem:[#allocation6 + $0x8] sm:$0xff]
    %v63 = vld [vmem:[#allocation3] sm:$0xff]
    %v64 = vld [vmem:[#allocation3 + $0x8] sm:$0xff]
    %v65 = vsub.f32 %v61, %v63
    %v66 = vsub.f32 %v62, %v64
    %v67 = vand.u32 2147483647, %v65
    %v68 = vand.u32 2147483647, %v66
    %v69 = vmul.f32 %v67, -2.0
    %v70 = vmul.f32 %v68, -2.0
    %v71 = vmul.f32 %v69, 1.442695
    %v72 = vpow.pop %v71
    %v73 = vmul.f32 %v70, 1.442695
    %v74 = vpow.pop %v73
    %v75 = vadd.f32 %v72, 1.0
    %v76 = vlog2.pop %v75
    %v77 = vmul.f32 %v76, 0.6931472
    %v78 = vmul.f32 -0.5, %v72
    %v79 = vadd.f32 %v78, 1.0
    %v80 = vmul.f32 %v79, %v72
    %v81 = vand.u32 2147483647, %v72
    %vm82 = vcmp.lt.f32.partialorder %v81, 0.0004427343
    %v83 = vsel %vm82, %v80, %v77
    %v84 = vadd.f32 %v74, 1.0
    %v85 = vlog2.pop %v84
    %v86 = vmul.f32 %v85, 0.6931472
    %v87 = vmul.f32 -0.5, %v74
    %v88 = vadd.f32 %v87, 1.0
    %v89 = vmul.f32 %v88, %v74
    %v90 = vand.u32 2147483647, %v74
    %vm91 = vcmp.lt.f32.partialorder %v90, 0.0004427343
    %v92 = vsel %vm91, %v89, %v86
    %v93 = vadd.f32 %v67, %v83
    %v94 = vadd.f32 %v68, %v92
    %v95 = vsub.f32 %v93, 0.6931472
    %v96 = vsub.f32 %v94, 0.6931472
    %vm97 = vcmp.gt.f32.partialorder %v67, 10.0
    %vm98 = vcmp.gt.f32.partialorder %v68, 10.0
    %v99 = vsel %vm97, %v67, %v95
    %v100 = vsel %vm98, %v68, %v96
    %v101 = vld [vmem:[#allocation2] sm:$0xff]
    %v102 = vadd.f32 %v99, %v100
    %v103 = vadd.f32 %v101, %v102
    %104 = vst [vmem:[#allocation2] sm:$0xff] %v103
    // Predicated region
    $region22: #{tpu_custom_call.1} parent=1 // pred_check
      %p105 = pneg %p56
    $region23: #{tpu_custom_call.1} parent=1 // pred_check_branch
      %107 = sbr.rel (%p105) target = $region25
    $region24: #{tpu_custom_call.1} parent=1 // pred_region
      %v108 = vld [vmem:[#allocation2] sm:$0xff]
      %109 = vadd.xlane.f32.xlu0 %v108
      %v110 = vpop.xlane.xlu0 %109
      %v111 = vrot.slane %v110, 4
      %v112 = vadd.f32 %v110, %v111
      %v113 = vrot.slane %v112, 2
      %v114 = vadd.f32 %v112, %v113
      %v115 = vrot.slane %v114, 1
      %v116 = vadd.f32 %v114, %v115
      %s117 = vtos %v116
      %s118 = scalar_lea.smem [#allocation8], 0
      %119 = sst [smem:[%s118]] %s117
    $region25: #{tpu_custom_call.1} parent=1 // pred_fallthru
      _
    // Predicated region
    $region26: #{tpu_custom_call.1} parent=1 // pred_check
      _
    $region27: #{tpu_custom_call.1} parent=1 // pred_check_branch
      %121 = sbr.rel (0) target = $region29
    $region28: #{tpu_custom_call.1} parent=1 // pred_region
      %123 = vsyncadd [#allocation5], 0
      %s125 = sshll.u32 %s2, 4
      %s126 = int_to_ptr.hbm [resolvable:$true] %s125
      %128 = dma.smem_to_hbm [#allocation8], 16, %s126, [#allocation5]
    $region29: #{tpu_custom_call.1} parent=1 // pred_fallthru
      _
    // Predicated region
    $region30: #{tpu_custom_call.1} parent=1 // pred_check
      _
    $region31: #{tpu_custom_call.1} parent=1 // pred_check_branch
      %130 = sbr.rel (0) target = $region33
    $region32: #{tpu_custom_call.1} parent=1 // pred_region
      %132 = dma.done [#allocation5], 16
    $region33: #{tpu_custom_call.1} parent=1 // pred_fallthru
      _
    %133 = sfence
    %134 = vsyncpa [#allocation4], 1
    %135 = vsyncpa [#allocation7], 1
    %136 = vsyncpa [#allocation5], 1

</llo_original>
